<compile_context>
chip_gen: v6e
topology: v6e:2x2x1
jax: 0.10.0
libtpu: 0.0.40
codegen_flags: <defaults>
</compile_context>

<pallas_src>
import functools

import jax
import jax.numpy as jnp
from jax import lax
from jax.experimental import pallas as pl
from jax.experimental.pallas import tpu as pltpu


def _qc_kernel(zs_ref, prows_ref, segT_ref, amatT_ref, neg_g_ref, m2g_ref,
               pt_ref, out_ref, *, onto_edge, n_constraints):
    """Feature-major QC projection: samples live on the 128-lane axis."""
    EPS = 1e-12
    f32 = jnp.float32

    zs = zs_ref[...]                                   # (F, TS)
    pt = pt_ref[...]                                   # (F, 1)

    # rays / normalization (torch: rays = zs - point; lengths = clamp_min(norm, eps))
    rays = zs - pt                                                # (F, TS)
    sumsq = jnp.sum(rays * rays, axis=0, keepdims=True)           # (1, TS)
    inv_len = lax.rsqrt(jnp.maximum(sumsq, EPS * EPS))            # EUP rsqrt
    r = rays * inv_len                                            # unit rays (F, TS)

    # Constraint-batched quadratic / mixed forms.  All matmul N dims are the
    # lane-dense sample tile.
    mr = jnp.dot(prows_ref[...], r,
                 preferred_element_type=f32)          # (C*F, TS): row c*F+f = (P_c r)[f]
    r_rep = jnp.tile(r, (n_constraints, 1))           # (C*F, TS): VPU/XLU replicate, no MXU
    rPr = jnp.dot(segT_ref[...], mr * r_rep,
                  preferred_element_type=f32)         # (C, TS): r^T P_c r
    tPr_qr = jnp.dot(amatT_ref[...], r,
                     preferred_element_type=f32)      # (C, TS): p^T P_c r + q_c . r

    neg_g = neg_g_ref[...]                            # (C, 1): -(q.p + 0.5 p^T P p - b)
    m2g = m2g_ref[...]                                # (C, 1): -2 * (q.p + 0.5 p^T P p - b)

    d4 = tPr_qr * tPr_qr + rPr * m2g
    # sqrt(d4 < 0) -> NaN -> mu_pos = +inf (constraint ignored), as in the reference.
    alpha_quad = (-tPr_qr + jnp.sqrt(d4)) / rPr
    alpha_lin = neg_g / tPr_qr

    mu = jnp.where(jnp.abs(rPr) <= EPS, alpha_lin, alpha_quad)
    mu_pos = jnp.where(mu >= 0.0, mu, jnp.inf)
    max_len = jnp.min(mu_pos, axis=0, keepdims=True)              # (1, TS)

    if onto_edge:
        ls = max_len
    else:
        lengths = jnp.maximum(sumsq * inv_len, EPS)               # clamp_min(||rays||, eps)
        ls = jnp.minimum(lengths, max_len)

    out_ref[...] = (pt + ls * r).astype(out_ref.dtype)


def _ceil_to(x, m):
    return ((x + m - 1) // m) * m


def qc_projection_center_diameter(zs, P, q, b, point, onto_edge=False,
                                  tile_s=None):
    """JAX/Pallas equivalent of QCProjectionCenterDiameterNN.forward."""
    S, F = zs.shape
    C = P.shape[0]
    f32 = jnp.float32

    zs = zs.astype(f32)
    P = P.astype(f32)
    q = q.astype(f32)
    b = b.astype(f32).reshape(C)
    point = point.astype(f32).reshape(F)

    # ---- hoist all (P, q, b, point)-only precomputation out of the kernel ----
    Pp = jnp.einsum('cfg,g->cf', P, point)                    # P_c @ point        (C, F)
    a_mat_T = Pp + q                                          # row c: P_c p + q_c (C, F)
    tPt = jnp.einsum('f,cfg,g->c', point, P, point)           # p^T P_c p          (C,)
    g = q @ point + 0.5 * tPt - b                             # (C,)
    neg_g = (-g).reshape(C, 1)                                # pre-negated
    m2g = (-2.0 * g).reshape(C, 1)                            # pre-scaled
    P_rows = P.reshape(C * F, F)                              # row c*F+f = P[c, f, :]
    seg_T = jnp.repeat(jnp.eye(C, dtype=f32), F, axis=1)      # (C, C*F) segment sum over f
    point_col = point.reshape(F, 1)

    zs_T = zs.T                                               # (F, S): feature-major

    resident_bytes = 4 * (C * F * F + C * C * F + C * F + 2 * C + F)

    # ---- tile_s from the per-sample VMEM footprint (v7x 64 MiB safe) ----
    if tile_s is None:
        if S < 256:
            tile_s = S                        # cannot split into 128-lane tiles
        else:
            per_sample = 4 * (5 * F + 3 * C * F + 8 * C + 8)
            budget = max((40 << 20) - 2 * resident_bytes - (4 << 20), 1 << 20)
            t = max(128, min(int(budget // per_sample), 32768))
            t = (t // 128) * 128
            # keep grid >= 2 so both v7x TensorCores get work & DMA overlaps compute
            t = min(t, _ceil_to(pl.cdiv(S, 2), 128))
            tile_s = t

    grid = (pl.cdiv(S, tile_s),)

    io_bytes = 2 * 2 * 4 * F * tile_s                         # zs + out, double-buffered
    interm_bytes = 4 * tile_s * (3 * C * F + 2 * F + 10 * C + 8)
    vmem_limit = int(min(max(io_bytes + interm_bytes + 2 * resident_bytes
                             + (6 << 20), 16 << 20), 50 << 20))

    # Single-buffer the grid-invariant residents only when they are big enough
    # to matter for the v7x VMEM budget (free on v5e/v6e, irrelevant if tiny).
    single_buffer_residents = resident_bytes >= (1 << 20)

    def resident_spec(shape):
        if single_buffer_residents:
            return pl.BlockSpec(shape, lambda i: (0, 0),
                                pipeline_mode=pl.Buffered(1))
        return pl.BlockSpec(shape, lambda i: (0, 0))

    kernel = functools.partial(_qc_kernel, onto_edge=onto_edge,
                               n_constraints=C)

    cost = pl.CostEstimate(
        flops=S * (2 * C * F * F + 2 * C * C * F + 2 * C * F + C * F
                   + 4 * F + 12 * C + 8),
        transcendentals=S * (C + 1),
        bytes_accessed=4 * (2 * S * F + C * F * F + C * C * F + C * F
                            + 2 * C + F),
    )

    out_T = pl.pallas_call(
        kernel,
        grid=grid,
        out_shape=jax.ShapeDtypeStruct((F, S), f32),
        in_specs=[
            pl.BlockSpec((F, tile_s), lambda i: (0, i)),      # zs^T: tiled over samples
            resident_spec((C * F, F)),                        # P_rows
            resident_spec((C, C * F)),                        # seg_T
            resident_spec((C, F)),                            # a_mat^T
            resident_spec((C, 1)),                            # -g
            resident_spec((C, 1)),                            # -2g
            resident_spec((F, 1)),                            # point
        ],
        out_specs=pl.BlockSpec((F, tile_s), lambda i: (0, i)),
        compiler_params=pltpu.CompilerParams(
            dimension_semantics=("parallel",),
            vmem_limit_bytes=vmem_limit,
        ),
        cost_estimate=cost,
    )(zs_T, P_rows, seg_T, a_mat_T, neg_g, m2g, point_col)

    return out_T.T                                            # back to (S, F)


def reference(zs, P, q, b, point, onto_edge=False):
    """Pure-JAX transcription of the PyTorch forward (for validation)."""
    EPS = 1e-12
    rays = zs - point[None]
    lengths = jnp.maximum(jnp.linalg.norm(rays, axis=1, keepdims=True), EPS)
    r = rays / lengths
    ps = jnp.broadcast_to(point[None], zs.shape)

    def quad(P, r):
        return jnp.einsum('scf,sf->sc', jnp.einsum('sf,ckf->sck', r, P), r)

    def mixed(t, P, r):
        return jnp.einsum('scf,sf->sc', jnp.einsum('sf,ckf->sck', t, P), r)

    rPr = quad(P, r)
    tPr_qr = mixed(ps, P, r) + jnp.einsum('cf,sf->sc', q, r)
    tPt = quad(P, ps)
    g = jnp.einsum('cf,sf->sc', q, ps) + 0.5 * tPt - b[None]
    d4 = jnp.square(tPr_qr) - rPr * (2.0 * g)
    alpha_quad = (-tPr_qr + jnp.sqrt(d4)) / rPr
    alpha_lin = -g / tPr_qr
    mu = jnp.where(jnp.abs(rPr) <= EPS, alpha_lin, alpha_quad)
    mu_pos = jnp.where(mu >= 0.0, mu, jnp.inf)
    max_len = jnp.min(mu_pos, axis=1)
    ls = max_len if onto_edge else jnp.minimum(lengths[:, 0], max_len)
    return ps + ls[:, None] * r


if __name__ == "__main__":
    key = jax.random.PRNGKey(0)
    S, F, C = 384, 8, 4   # n_samples, n_features, n_constraints

    k1, k2, k3 = jax.random.split(key, 3)
    # Deterministic synthetic parameters: PSD quadratic constraints with an
    # interior reference point, so all max-length roots are real.
    A = 0.3 * jax.random.normal(k1, (C, F, F), jnp.float32)
    P = jnp.einsum('cik,cjk->cij', A, A) + jnp.eye(F, dtype=jnp.float32)[None]
    q = 0.1 * jax.random.normal(k2, (C, F), jnp.float32)
    b = jnp.ones((C,), jnp.float32)
    point = jnp.zeros((F,), jnp.float32)

    zs = jax.random.normal(k3, (S, F), jnp.float32)

    for onto_edge in (False, True):
        xs = qc_projection_center_diameter(zs, P, q, b, point,
                                           onto_edge=onto_edge)
        xs = jax.block_until_ready(xs)
        ref = reference(zs, P, q, b, point, onto_edge=onto_edge)
        assert xs.shape == (S, F)
        if not bool(jnp.allclose(xs, ref, rtol=1e-4, atol=1e-4)):
            raise AssertionError(
                f"Pallas kernel output mismatch vs reference (onto_edge={onto_edge})")

    print("KERNEL_OK")
</pallas_src>

<mosaic_0001>
module attributes {stable_mosaic.version = 11 : i64} {
  func.func @_qc_kernel(%arg0: i32, %arg1: memref<8x256xf32, #tpu.memory_space<vmem>>, %arg2: memref<32x8xf32, #tpu.memory_space<vmem>>, %arg3: memref<4x32xf32, #tpu.memory_space<vmem>>, %arg4: memref<4x8xf32, #tpu.memory_space<vmem>>, %arg5: memref<4x1xf32, #tpu.memory_space<vmem>>, %arg6: memref<4x1xf32, #tpu.memory_space<vmem>>, %arg7: memref<8x1xf32, #tpu.memory_space<vmem>>, %arg8: memref<8x256xf32, #tpu.memory_space<vmem>>) attributes {dimension_semantics = [#tpu.dimension_semantics<parallel>], iteration_bounds = array<i64: 2>, scalar_prefetch = 0 : i64, scratch_operands = 0 : i64, tpu.core_type = #tpu.core_type<tc>, window_params = [{transform_indices = @transform_0, window_bounds = array<i64: 8, 256>}, {pipeline_mode = #tpu.pipeline_mode<synchronous>, transform_indices = @transform_1, window_bounds = array<i64: 32, 8>}, {pipeline_mode = #tpu.pipeline_mode<synchronous>, transform_indices = @transform_2, window_bounds = array<i64: 4, 32>}, {pipeline_mode = #tpu.pipeline_mode<synchronous>, transform_indices = @transform_3, window_bounds = array<i64: 4, 8>}, {pipeline_mode = #tpu.pipeline_mode<synchronous>, transform_indices = @transform_4, window_bounds = array<i64: 4, 1>}, {pipeline_mode = #tpu.pipeline_mode<synchronous>, transform_indices = @transform_5, window_bounds = array<i64: 4, 1>}, {pipeline_mode = #tpu.pipeline_mode<synchronous>, transform_indices = @transform_6, window_bounds = array<i64: 8, 1>}, {transform_indices = @transform_7, window_bounds = array<i64: 8, 256>}]} {
    %c0 = arith.constant 0 : index
    %c0_0 = arith.constant 0 : index
    %0 = vector.load %arg1[%c0, %c0_0] : memref<8x256xf32, #tpu.memory_space<vmem>>, vector<8x256xf32>
    %c0_1 = arith.constant 0 : index
    %c0_2 = arith.constant 0 : index
    %1 = vector.load %arg7[%c0_1, %c0_2] : memref<8x1xf32, #tpu.memory_space<vmem>>, vector<8x1xf32>
    %2 = vector.broadcast %1 : vector<8x1xf32> to vector<8x256xf32>
    %3 = arith.subf %0, %2 : vector<8x256xf32>
    %4 = arith.mulf %3, %3 : vector<8x256xf32>
    %cst = arith.constant dense<0.000000e+00> : vector<256xf32>
    %5 = vector.multi_reduction <add>, %4, %cst [0] : vector<8x256xf32> to vector<256xf32>
    %6 = vector.shape_cast %5 : vector<256xf32> to vector<1x256xf32>
    %cst_3 = arith.constant 1.000000e-24 : f32
    %7 = vector.broadcast %cst_3 : f32 to vector<1x256xf32>
    %8 = arith.maximumf %6, %7 : vector<1x256xf32>
    %9 = math.rsqrt %8 : vector<1x256xf32>
    %10 = vector.broadcast %9 : vector<1x256xf32> to vector<8x256xf32>
    %11 = arith.mulf %3, %10 : vector<8x256xf32>
    %c0_4 = arith.constant 0 : index
    %c0_5 = arith.constant 0 : index
    %12 = vector.load %arg2[%c0_4, %c0_5] : memref<32x8xf32, #tpu.memory_space<vmem>>, vector<32x8xf32>
    %cst_6 = arith.constant dense<0.000000e+00> : vector<32x256xf32>
    %13 = tpu.matmul %12, %11, %cst_6 {dimension_numbers = #tpu.dot_dimension_numbers<[1], [0], [0], [1], [0, 0, 1, 1], [], []>} : vector<32x8xf32>, vector<8x256xf32>, vector<32x256xf32> -> vector<32x256xf32>
    %14 = tpu.concatenate %11, %11, %11, %11 in 0 : vector<8x256xf32>, vector<8x256xf32>, vector<8x256xf32>, vector<8x256xf32> -> vector<32x256xf32>
    %c0_7 = arith.constant 0 : index
    %c0_8 = arith.constant 0 : index
    %15 = vector.load %arg3[%c0_7, %c0_8] : memref<4x32xf32, #tpu.memory_space<vmem>>, vector<4x32xf32>
    %16 = arith.mulf %13, %14 : vector<32x256xf32>
    %cst_9 = arith.constant dense<0.000000e+00> : vector<4x256xf32>
    %17 = tpu.matmul %15, %16, %cst_9 {dimension_numbers = #tpu.dot_dimension_numbers<[1], [0], [0], [1], [0, 0, 1, 1], [], []>} : vector<4x32xf32>, vector<32x256xf32>, vector<4x256xf32> -> vector<4x256xf32>
    %c0_10 = arith.constant 0 : index
    %c0_11 = arith.constant 0 : index
    %18 = vector.load %arg4[%c0_10, %c0_11] : memref<4x8xf32, #tpu.memory_space<vmem>>, vector<4x8xf32>
    %cst_12 = arith.constant dense<0.000000e+00> : vector<4x256xf32>
    %19 = tpu.matmul %18, %11, %cst_12 {dimension_numbers = #tpu.dot_dimension_numbers<[1], [0], [0], [1], [0, 0, 1, 1], [], []>} : vector<4x8xf32>, vector<8x256xf32>, vector<4x256xf32> -> vector<4x256xf32>
    %c0_13 = arith.constant 0 : index
    %c0_14 = arith.constant 0 : index
    %20 = vector.load %arg5[%c0_13, %c0_14] : memref<4x1xf32, #tpu.memory_space<vmem>>, vector<4x1xf32>
    %c0_15 = arith.constant 0 : index
    %c0_16 = arith.constant 0 : index
    %21 = vector.load %arg6[%c0_15, %c0_16] : memref<4x1xf32, #tpu.memory_space<vmem>>, vector<4x1xf32>
    %22 = arith.mulf %19, %19 : vector<4x256xf32>
    %23 = vector.broadcast %21 : vector<4x1xf32> to vector<4x256xf32>
    %24 = arith.mulf %17, %23 : vector<4x256xf32>
    %25 = arith.addf %22, %24 : vector<4x256xf32>
    %cst_17 = arith.constant 0.000000e+00 : f32
    %26 = vector.broadcast %cst_17 : f32 to vector<4x256xf32>
    %27 = arith.subf %26, %19 : vector<4x256xf32>
    %28 = math.sqrt %25 : vector<4x256xf32>
    %29 = arith.addf %27, %28 : vector<4x256xf32>
    %30 = arith.divf %29, %17 : vector<4x256xf32>
    %31 = vector.broadcast %20 : vector<4x1xf32> to vector<4x256xf32>
    %32 = arith.divf %31, %19 : vector<4x256xf32>
    %33 = math.absf %17 : vector<4x256xf32>
    %cst_18 = arith.constant 9.99999996E-13 : f32
    %34 = vector.broadcast %cst_18 : f32 to vector<4x256xf32>
    %35 = arith.cmpf ole, %33, %34 : vector<4x256xf32>
    %36 = arith.select %35, %32, %30 : vector<4x256xi1>, vector<4x256xf32>
    %cst_19 = arith.constant 0.000000e+00 : f32
    %37 = vector.broadcast %cst_19 : f32 to vector<4x256xf32>
    %38 = arith.cmpf oge, %36, %37 : vector<4x256xf32>
    %cst_20 = arith.constant 0x7F800000 : f32
    %39 = vector.broadcast %cst_20 : f32 to vector<4x256xf32>
    %40 = arith.select %38, %36, %39 : vector<4x256xi1>, vector<4x256xf32>
    %cst_21 = arith.constant dense<0x7F800000> : vector<256xf32>
    %41 = vector.multi_reduction <minimumf>, %40, %cst_21 [0] : vector<4x256xf32> to vector<256xf32>
    %42 = vector.shape_cast %41 : vector<256xf32> to vector<1x256xf32>
    %43 = arith.mulf %6, %9 : vector<1x256xf32>
    %cst_22 = arith.constant 9.99999996E-13 : f32
    %44 = vector.broadcast %cst_22 : f32 to vector<1x256xf32>
    %45 = arith.maximumf %43, %44 : vector<1x256xf32>
    %46 = arith.minimumf %45, %42 : vector<1x256xf32>
    %47 = vector.broadcast %46 : vector<1x256xf32> to vector<8x256xf32>
    %48 = arith.mulf %47, %11 : vector<8x256xf32>
    %49 = vector.broadcast %1 : vector<8x1xf32> to vector<8x256xf32>
    %50 = arith.addf %49, %48 : vector<8x256xf32>
    %c0_23 = arith.constant 0 : index
    %c0_24 = arith.constant 0 : index
    %51 = vector.load %arg8[%c0_23, %c0_24] : memref<8x256xf32, #tpu.memory_space<vmem>>, vector<8x256xf32>
    tpu.vector_store %arg8[%c0_23, %c0_24], %50 {strides = array<i32>} : memref<8x256xf32, #tpu.memory_space<vmem>>, vector<8x256xf32>,
    return
  }
  func.func @transform_0(%arg0: i32) -> (i32, i32) {
    %c0_i32 = arith.constant 0 : i32
    %c0_i32_0 = arith.constant 0 : i32
    return %c0_i32, %arg0 : i32, i32
  }
  func.func @transform_1(%arg0: i32) -> (i32, i32) {
    %c0_i32 = arith.constant 0 : i32
    %c0_i32_0 = arith.constant 0 : i32
    %c0_i32_1 = arith.constant 0 : i32
    return %c0_i32, %c0_i32_0 : i32, i32
  }
  func.func @transform_2(%arg0: i32) -> (i32, i32) {
    %c0_i32 = arith.constant 0 : i32
    %c0_i32_0 = arith.constant 0 : i32
    %c0_i32_1 = arith.constant 0 : i32
    return %c0_i32, %c0_i32_0 : i32, i32
  }
  func.func @transform_3(%arg0: i32) -> (i32, i32) {
    %c0_i32 = arith.constant 0 : i32
    %c0_i32_0 = arith.constant 0 : i32
    %c0_i32_1 = arith.constant 0 : i32
    return %c0_i32, %c0_i32_0 : i32, i32
  }
  func.func @transform_4(%arg0: i32) -> (i32, i32) {
    %c0_i32 = arith.constant 0 : i32
    %c0_i32_0 = arith.constant 0 : i32
    %c0_i32_1 = arith.constant 0 : i32
    return %c0_i32, %c0_i32_0 : i32, i32
  }
  func.func @transform_5(%arg0: i32) -> (i32, i32) {
    %c0_i32 = arith.constant 0 : i32
    %c0_i32_0 = arith.constant 0 : i32
    %c0_i32_1 = arith.constant 0 : i32
    return %c0_i32, %c0_i32_0 : i32, i32
  }
  func.func @transform_6(%arg0: i32) -> (i32, i32) {
    %c0_i32 = arith.constant 0 : i32
    %c0_i32_0 = arith.constant 0 : i32
    %c0_i32_1 = arith.constant 0 : i32
    return %c0_i32, %c0_i32_0 : i32, i32
  }
  func.func @transform_7(%arg0: i32) -> (i32, i32) {
    %c0_i32 = arith.constant 0 : i32
    %c0_i32_0 = arith.constant 0 : i32
    return %c0_i32, %arg0 : i32, i32
  }
}

</mosaic_0001>

<llo_original>
// kernel: tpu_custom_call.1
$region0: #{tpu_custom_call.1}
  #allocation0 [shape = 'u32[]', space=smem, size = 0x4, offset = 0x4, fixed_abs, tag = 'smem constant byte address 0x4 - core index']
  #allocation1 [shape = 'u32[144,128]{1,0:T(1,128)}', space=vmem, size = 0x12000, scoped, tag = 'internal scratch']
  %s0 = inlined_call_operand.vmem [shape: f32[8,384], index: 0, kind: input, shape index: {}]
  %s1 = inlined_call_operand.vmem [shape: f32[32,8], index: 1, kind: input, shape index: {}]
  %s2 = inlined_call_operand.vmem [shape: f32[4,32], index: 2, kind: input, shape index: {}]
  %s3 = inlined_call_operand.vmem [shape: f32[4,8], index: 3, kind: input, shape index: {}]
  %s4 = inlined_call_operand.vmem [shape: f32[4,1], index: 4, kind: input, shape index: {}]
  %s5 = inlined_call_operand.vmem [shape: f32[4,1], index: 5, kind: input, shape index: {}]
  %s6 = inlined_call_operand.vmem [shape: f32[8,1], index: 6, kind: input, shape index: {}]
  %s7 = inlined_call_operand.hbm [shape: f32[8,384], index: 7, kind: output, shape index: {}]
  %s8 = sld [smem:[#allocation0]]
  $region61: #{tpu_custom_call.1} parent=0
    _
  %s10 = ssub.s32 1, %s8
  %s11 = scalar_select 0, %s10, %s8
  $region1: #{tpu_custom_call.1} parent=0
    #allocation2 [shape = 'u8[16384]{0}', space=vmem, size = 0x4000, scoped, tag = 'output window, operand 0']
    #allocation3 [shape = 's32[2]{0}', space=sflag, size = 0x8, scoped, tag = 'scoped memory for tpu_custom_call.1']
    %12 = vsyncpa [#allocation3], 0
    %s13 = scalar_lea.sflag [#allocation3], 1
    %14 = vsyncpa %s13, 0
    loop: start=0, step=1, limit=4
    $region2: #{tpu_custom_call.1} parent=1 // loop_pre_header
      _
    $region3: #{tpu_custom_call.1} parent=1 // loop_header
      %s16 = sphi 0, %s20
      %p17 = scmp.ge.s32.totalorder %s16, 4
      %s26 = sphi 0, %s28
      %s29 = sphi 0, %s26
      %s30 = sphi 0, %s29
      %s46 = sphi 0, %s30
      %s50 = sphi 0, %s50
      %s52 = sphi 0, %s50
      %s53 = sphi 0, %s52
      %s67 = sphi 0, %s53
      %s71 = sphi 0, %s71
      %s73 = sphi 0, %s71
      %s74 = sphi 0, %s73
      %s88 = sphi 0, %s74
      %s92 = sphi 0, %s92
      %s94 = sphi 0, %s92
      %s95 = sphi 0, %s94
      %s109 = sphi 0, %s95
      %s113 = sphi 0, %s113
      %s115 = sphi 0, %s113
      %s116 = sphi 0, %s115
      %s130 = sphi 0, %s116
      %s134 = sphi 0, %s134
      %s136 = sphi 0, %s134
      %s137 = sphi 0, %s136
      %s151 = sphi 0, %s137
      %s155 = sphi 0, %s155
      %s157 = sphi 0, %s155
      %s158 = sphi 0, %s157
      %s172 = sphi 0, %s158
      %s178 = sphi 0, %s180
      %s181 = sphi 0, %s178
      %s182 = sphi 0, %s181
      %s198 = sphi 0, %s182
    $region4: #{tpu_custom_call.1} parent=1 // loop_header_branch
      %19 = sbr.rel (%p17) target = $region8
    $region5: #{tpu_custom_call.1} parent=1 // loop_body
      %s21 = ssub.s32 %s16, 1
      %s22 = ssub.s32 %s16, 2
      %s23 = sadd.s32 %s16, 1
      %s24 = ssub.s32 %s16, %s23
      %p25 = scmp.eq.s32.totalorder %s24, 0
      %s27 = sadd.s32 %s26, 1
      %s28 = scalar_select %p25, %s26, %s27
      %p31 = pneg %p25
      %p32 = scmp.eq.s32.totalorder %s16, 1
      %p33 = por %p31, %p32
      %p34 = scmp.ne.s32.totalorder %s26, %s29
      %p35 = scmp.eq.s32.totalorder %s16, 0
      %p36 = por %p34, %p35
      %p37 = scmp.ne.s32.totalorder %s26, %s29
      %p38 = scmp.eq.s32.totalorder %s21, 1
      %p39 = por %p37, %p38
      %p40 = scmp.ne.s32.totalorder %s29, %s30
      %p41 = scmp.eq.s32.totalorder %s21, 0
      %p42 = por %p40, %p41
      %p43 = scmp.ne.s32.totalorder %s29, %s30
      %p44 = scmp.eq.s32.totalorder %s22, 1
      %p45 = por %p43, %p44
      %p47 = scmp.ne.s32.totalorder %s30, %s46
      %p48 = scmp.eq.s32.totalorder %s22, 0
      %p49 = por %p47, %p48
      %s51 = sadd.s32 %s50, 1
      %p54 = scmp.eq.s32.totalorder %s16, 1
      %p55 = scmp.ne.s32.totalorder %s50, %s52
      %p56 = scmp.eq.s32.totalorder %s16, 0
      %p57 = por %p55, %p56
      %p58 = scmp.ne.s32.totalorder %s50, %s52
      %p59 = scmp.eq.s32.totalorder %s21, 1
      %p60 = por %p58, %p59
      %p61 = scmp.ne.s32.totalorder %s52, %s53
      %p62 = scmp.eq.s32.totalorder %s21, 0
      %p63 = por %p61, %p62
      %p64 = scmp.ne.s32.totalorder %s52, %s53
      %p65 = scmp.eq.s32.totalorder %s22, 1
      %p66 = por %p64, %p65
      %p68 = scmp.ne.s32.totalorder %s53, %s67
      %p69 = scmp.eq.s32.totalorder %s22, 0
      %p70 = por %p68, %p69
      %s72 = sadd.s32 %s71, 1
      %p75 = scmp.eq.s32.totalorder %s16, 1
      %p76 = scmp.ne.s32.totalorder %s71, %s73
      %p77 = scmp.eq.s32.totalorder %s16, 0
      %p78 = por %p76, %p77
      %p79 = scmp.ne.s32.totalorder %s71, %s73
      %p80 = scmp.eq.s32.totalorder %s21, 1
      %p81 = por %p79, %p80
      %p82 = scmp.ne.s32.totalorder %s73, %s74
      %p83 = scmp.eq.s32.totalorder %s21, 0
      %p84 = por %p82, %p83
      %p85 = scmp.ne.s32.totalorder %s73, %s74
      %p86 = scmp.eq.s32.totalorder %s22, 1
      %p87 = por %p85, %p86
      %p89 = scmp.ne.s32.totalorder %s74, %s88
      %p90 = scmp.eq.s32.totalorder %s22, 0
      %p91 = por %p89, %p90
      %s93 = sadd.s32 %s92, 1
      %p96 = scmp.eq.s32.totalorder %s16, 1
      %p97 = scmp.ne.s32.totalorder %s92, %s94
      %p98 = scmp.eq.s32.totalorder %s16, 0
      %p99 = por %p97, %p98
      %p100 = scmp.ne.s32.totalorder %s92, %s94
      %p101 = scmp.eq.s32.totalorder %s21, 1
      %p102 = por %p100, %p101
      %p103 = scmp.ne.s32.totalorder %s94, %s95
      %p104 = scmp.eq.s32.totalorder %s21, 0
      %p105 = por %p103, %p104
      %p106 = scmp.ne.s32.totalorder %s94, %s95
      %p107 = scmp.eq.s32.totalorder %s22, 1
      %p108 = por %p106, %p107
      %p110 = scmp.ne.s32.totalorder %s95, %s109
      %p111 = scmp.eq.s32.totalorder %s22, 0
      %p112 = por %p110, %p111
      %s114 = sadd.s32 %s113, 1
      %p117 = scmp.eq.s32.totalorder %s16, 1
      %p118 = scmp.ne.s32.totalorder %s113, %s115
      %p119 = scmp.eq.s32.totalorder %s16, 0
      %p120 = por %p118, %p119
      %p121 = scmp.ne.s32.totalorder %s113, %s115
      %p122 = scmp.eq.s32.totalorder %s21, 1
      %p123 = por %p121, %p122
      %p124 = scmp.ne.s32.totalorder %s115, %s116
      %p125 = scmp.eq.s32.totalorder %s21, 0
      %p126 = por %p124, %p125
      %p127 = scmp.ne.s32.totalorder %s115, %s116
      %p128 = scmp.eq.s32.totalorder %s22, 1
      %p129 = por %p127, %p128
      %p131 = scmp.ne.s32.totalorder %s116, %s130
      %p132 = scmp.eq.s32.totalorder %s22, 0
      %p133 = por %p131, %p132
      %s135 = sadd.s32 %s134, 1
      %p138 = scmp.eq.s32.totalorder %s16, 1
      %p139 = scmp.ne.s32.totalorder %s134, %s136
      %p140 = scmp.eq.s32.totalorder %s16, 0
      %p141 = por %p139, %p140
      %p142 = scmp.ne.s32.totalorder %s134, %s136
      %p143 = scmp.eq.s32.totalorder %s21, 1
      %p144 = por %p142, %p143
      %p145 = scmp.ne.s32.totalorder %s136, %s137
      %p146 = scmp.eq.s32.totalorder %s21, 0
      %p147 = por %p145, %p146
      %p148 = scmp.ne.s32.totalorder %s136, %s137
      %p149 = scmp.eq.s32.totalorder %s22, 1
      %p150 = por %p148, %p149
      %p152 = scmp.ne.s32.totalorder %s137, %s151
      %p153 = scmp.eq.s32.totalorder %s22, 0
      %p154 = por %p152, %p153
      %s156 = sadd.s32 %s155, 1
      %p159 = scmp.eq.s32.totalorder %s16, 1
      %p160 = scmp.ne.s32.totalorder %s155, %s157
      %p161 = scmp.eq.s32.totalorder %s16, 0
      %p162 = por %p160, %p161
      %p163 = scmp.ne.s32.totalorder %s155, %s157
      %p164 = scmp.eq.s32.totalorder %s21, 1
      %p165 = por %p163, %p164
      %p166 = scmp.ne.s32.totalorder %s157, %s158
      %p167 = scmp.eq.s32.totalorder %s21, 0
      %p168 = por %p166, %p167
      %p169 = scmp.ne.s32.totalorder %s157, %s158
      %p170 = scmp.eq.s32.totalorder %s22, 1
      %p171 = por %p169, %p170
      %p173 = scmp.ne.s32.totalorder %s158, %s172
      %p174 = scmp.eq.s32.totalorder %s22, 0
      %p175 = por %p173, %p174
      %s176 = ssub.s32 %s16, %s23
      %p177 = scmp.eq.s32.totalorder %s176, 0
      %s179 = sadd.s32 %s178, 1
      %s180 = scalar_select %p177, %s178, %s179
      %p183 = pneg %p177
      %p184 = scmp.eq.s32.totalorder %s16, 1
      %p185 = por %p183, %p184
      %p186 = scmp.ne.s32.totalorder %s178, %s181
      %p187 = scmp.eq.s32.totalorder %s16, 0
      %p188 = por %p186, %p187
      %p189 = scmp.ne.s32.totalorder %s178, %s181
      %p190 = scmp.eq.s32.totalorder %s21, 1
      %p191 = por %p189, %p190
      %p192 = scmp.ne.s32.totalorder %s181, %s182
      %p193 = scmp.eq.s32.totalorder %s21, 0
      %p194 = por %p192, %p193
      %p195 = scmp.ne.s32.totalorder %s181, %s182
      %p196 = scmp.eq.s32.totalorder %s22, 1
      %p197 = por %p195, %p196
      %p199 = scmp.ne.s32.totalorder %s182, %s198
      %p200 = scmp.eq.s32.totalorder %s22, 0
      %p201 = por %p199, %p200
      %p202 = scmp.le.s32.totalorder 1, %s16
      %p203 = scmp.lt.s32.totalorder %s16, 3
      %p204 = pnand %p202, %p203
      %p205 = pneg %p204
      // Predicated region
      $region9: #{tpu_custom_call.1} parent=5 // pred_check
        _
      $region10: #{tpu_custom_call.1} parent=5 // pred_check_branch
        %207 = sbr.rel (%p204) target = $region12
      $region11: #{tpu_custom_call.1} parent=5 // pred_region
        %s208 = ssub.s32 %s16, 1
        // Predicated region
        $region13: #{tpu_custom_call.1} parent=11 // pred_check
          %p209 = pneg %p63
        $region14: #{tpu_custom_call.1} parent=11 // pred_check_branch
          %211 = sbr.rel (%p209) target = $region16
        $region15: #{tpu_custom_call.1} parent=11 // pred_region
          _
        $region16: #{tpu_custom_call.1} parent=11 // pred_fallthru
          _
        // Predicated region
        $region17: #{tpu_custom_call.1} parent=11 // pred_check
          %p212 = pneg %p84
        $region18: #{tpu_custom_call.1} parent=11 // pred_check_branch
          %214 = sbr.rel (%p212) target = $region20
        $region19: #{tpu_custom_call.1} parent=11 // pred_region
          _
        $region20: #{tpu_custom_call.1} parent=11 // pred_fallthru
          _
        // Predicated region
        $region21: #{tpu_custom_call.1} parent=11 // pred_check
          %p215 = pneg %p105
        $region22: #{tpu_custom_call.1} parent=11 // pred_check_branch
          %217 = sbr.rel (%p215) target = $region24
        $region23: #{tpu_custom_call.1} parent=11 // pred_region
          _
        $region24: #{tpu_custom_call.1} parent=11 // pred_fallthru
          _
        // Predicated region
        $region25: #{tpu_custom_call.1} parent=11 // pred_check
          %p218 = pneg %p126
        $region26: #{tpu_custom_call.1} parent=11 // pred_check_branch
          %220 = sbr.rel (%p218) target = $region28
        $region27: #{tpu_custom_call.1} parent=11 // pred_region
          _
        $region28: #{tpu_custom_call.1} parent=11 // pred_fallthru
          _
        // Predicated region
        $region29: #{tpu_custom_call.1} parent=11 // pred_check
          %p221 = pneg %p147
        $region30: #{tpu_custom_call.1} parent=11 // pred_check_branch
          %223 = sbr.rel (%p221) target = $region32
        $region31: #{tpu_custom_call.1} parent=11 // pred_region
          _
        $region32: #{tpu_custom_call.1} parent=11 // pred_fallthru
          _
        // Predicated region
        $region33: #{tpu_custom_call.1} parent=11 // pred_check
          %p224 = pneg %p168
        $region34: #{tpu_custom_call.1} parent=11 // pred_check_branch
          %226 = sbr.rel (%p224) target = $region36
        $region35: #{tpu_custom_call.1} parent=11 // pred_region
          _
        $region36: #{tpu_custom_call.1} parent=11 // pred_fallthru
          _
      $region12: #{tpu_custom_call.1} parent=5 // pred_fallthru
        _
      %p227 = scmp.lt.s32.totalorder %s16, 2
      // Predicated region
      $region37: #{tpu_custom_call.1} parent=5 // pred_check
        %p228 = pneg %p227
      $region38: #{tpu_custom_call.1} parent=5 // pred_check_branch
        %230 = sbr.rel (%p228) target = $region40
      $region39: #{tpu_custom_call.1} parent=5 // pred_region
        // Predicated region
        $region41: #{tpu_custom_call.1} parent=39 // pred_check
          %p231 = pneg %p36
        $region42: #{tpu_custom_call.1} parent=39 // pred_check_branch
          %233 = sbr.rel (%p231) target = $region44
        $region43: #{tpu_custom_call.1} parent=39 // pred_region
          %s234 = smul.u32 2, %s16
          %s235 = ssub.s32 3, %s234
          %p236 = scmp.lt.s32.totalorder %s235, 2
          %s237 = scalar_select %p236, %s235, 2
          %s238 = smul.u32 128, %s237
          %p239 = scmp.lt.s32.totalorder %s234, 2
          %s240 = scalar_select %p239, %s234, 2
          %s241 = smul.addr %s240, 8
          %s242 = scalar_lea.vmem %s0, %s241
          %s243 = smul.u32 2, %s16
          %s244 = ssub.s32 3, %s243
          %p245 = scmp.lt.s32.totalorder %s244, 2
          %s246 = scalar_select %p245, %s244, 2
          %s247 = smul.u32 128, %s246
        $region44: #{tpu_custom_call.1} parent=39 // pred_fallthru
          _
      $region40: #{tpu_custom_call.1} parent=5 // pred_fallthru
        _
      %p248 = scmp.le.s32.totalorder 1, %s16
      %p249 = scmp.lt.s32.totalorder %s16, 3
      %p250 = pnand %p248, %p249
      %p251 = pneg %p250
      // Predicated region
      $region45: #{tpu_custom_call.1} parent=5 // pred_check
        _
      $region46: #{tpu_custom_call.1} parent=5 // pred_check_branch
        %253 = sbr.rel (%p250) target = $region48
      $region47: #{tpu_custom_call.1} parent=5 // pred_region
        %s254 = ssub.s32 %s16, 1
        %s255 = smul.u32 2, %s21
        %s256 = ssub.s32 3, %s255
        %p257 = scmp.lt.s32.totalorder %s256, 2
        %s258 = scalar_select %p257, %s256, 2
        %s259 = smul.u32 128, %s258
        %p260 = scmp.lt.s32.totalorder %s255, 2
        %s261 = scalar_select %p260, %s255, 2
        %s262 = smul.addr %s261, 8
        %s263 = scalar_lea.vmem %s0, %s262
        %p264 = pneg %p42
        %p265 = pneg %p39
        %p266 = pneg %p63
        %p267 = pneg %p60
        %p268 = pneg %p84
        %p269 = pneg %p81
        %p270 = pneg %p105
        %p271 = pneg %p102
        %p272 = pneg %p126
        %p273 = pneg %p123
        %p274 = pneg %p147
        %p275 = pneg %p144
        %p276 = pneg %p168
        %p277 = pneg %p165
        %p278 = pneg %p194
        %p279 = pneg %p191
        %s280 = sand.u32 %s181, 1
        %s281 = scalar_lea.sflag [#allocation3], %s280
        %s282 = sand.u32 %s181, 1
        %s283 = smul.addr %s282, 16
        %s284 = scalar_lea.vmem [#allocation2], %s283
        %s285 = smul.u32 2, %s21
        %s286 = ssub.s32 3, %s285
        %p287 = scmp.lt.s32.totalorder %s286, 2
        %s288 = scalar_select %p287, %s286, 2
        %s289 = smul.u32 128, %s288
        %p290 = scmp.lt.s32.totalorder %s285, 2
        %s291 = scalar_select %p290, %s285, 2
        %s292 = smul.addr %s291, 8
        %s293 = scalar_lea.vmem %s0, %s292
        %s294 = smul.u32 2, %s21
        %s295 = ssub.s32 3, %s294
        %p296 = scmp.lt.s32.totalorder %s295, 2
        %s297 = scalar_select %p296, %s295, 2
        %s298 = smul.u32 128, %s297
        %s299 = smul.u32 2, %s21
        %s300 = ssub.s32 3, %s299
        %p301 = scmp.lt.s32.totalorder %s300, 2
        %s302 = scalar_select %p301, %s300, 2
        %s303 = smul.u32 128, %s302
        %v304 = vld [vmem:[%s293] sm:$0xff]
        %v305 = vld [vmem:[%s293 + $0x8] sm:$0xff]
        %v306 = vld [vmem:[%s6] sm:$0xff]
        %308 = vset.pattern.permute.xlu0 0
        %309 = vperm.xlu0 %308, %v306
        %v310 = vpop.permute.xlu0 %309
        %v312 = vsub.f32 %v304, %v310
        %v313 = vsub.f32 %v305, %v310
        %v314 = vmul.f32 %v312, %v312
        %v315 = vmul.f32 %v313, %v313
        %v316 = vrot.slane %v314, 4
        %v317 = vadd.f32 %v314, %v316
        %v318 = vrot.slane %v317, 2
        %v319 = vadd.f32 %v317, %v318
        %v320 = vrot.slane %v319, 1
        %v321 = vadd.f32 %v319, %v320
        %v322 = vrot.slane %v315, 4
        %v323 = vadd.f32 %v315, %v322
        %v324 = vrot.slane %v323, 2
        %v325 = vadd.f32 %v323, %v324
        %v326 = vrot.slane %v325, 1
        %v327 = vadd.f32 %v325, %v326
        %v328 = vmax.f32 %v321, 1e-24
        %v329 = vmax.f32 %v327, 1e-24
        %v330 = vrsqrt.pop %v328
        %v331 = vrsqrt.pop %v329
        %v332 = vmul.f32 %v312, %v330
        %v333 = vmul.f32 %v313, %v331
        %v334 = vld [vmem:[%s1] sm:$0xff]
        %v335 = vld [vmem:[%s1 + $0x8] sm:$0xff]
        %v336 = vld [vmem:[%s1 + $0x10] sm:$0xff]
        %v337 = vld [vmem:[%s1 + $0x18] sm:$0xff]
        %vm338 = vcmask 64512
        %v340 = vsel %vm338, %v334, 0
        %v343 = vsel %vm338, %v335, 0
        %v346 = vsel %vm338, %v336, 0
        %v349 = vsel %vm338, %v337, 0
        %351 = vmatprep.subr.mxu0 0.0
        %352 = vmatpush1.msra.mxu0 0.0
        %353 = vmatprep.subr.mxu0 0.0
        %354 = vmatpush1.msra.mxu0 0.0
        %355 = vmatprep.subr.mxu0 0.0
        %356 = vmatpush1.msra.mxu0 0.0
        %357 = vmatprep.subr.mxu0 0.0
        %358 = vmatpush1.msra.mxu0 0.0
        %359 = vmatprep.subr.mxu0 0.0
        %360 = vmatpush1.msra.mxu0 0.0
        %361 = vmatprep.subr.mxu0 0.0
        %362 = vmatpush1.msra.mxu0 0.0
        %363 = vmatprep.subr.mxu0 0.0
        %364 = vmatpush1.msra.mxu0 0.0
        %365 = vmatprep.subr.mxu0 0.0
        %366 = vmatpush1.msra.mxu0 0.0
        %367 = vmatprep.subr.mxu0 0.0
        %368 = vmatpush1.msra.mxu0 0.0
        %369 = vmatprep.subr.mxu0 0.0
        %370 = vmatpush1.msra.mxu0 0.0
        %371 = vmatprep.subr.mxu0 0.0
        %372 = vmatpush1.msra.mxu0 0.0
        %373 = vmatprep.subr.mxu0 0.0
        %374 = vmatpush1.msra.mxu0 0.0
        %375 = vmatprep.subr.mxu0 0.0
        %376 = vmatpush1.msra.mxu0 0.0
        %377 = vmatprep.subr.mxu0 0.0
        %378 = vmatpush1.msra.mxu0 0.0
        %379 = vmatprep.subr.mxu0 0.0
        %380 = vmatpush1.msra.mxu0 0.0
        %381 = vmatprep.subr.mxu0 %v333
        %382 = vmatpush1.msra.mxu0 %v332
        %383 = vmatprep.subr.mxu0 0.0
        %384 = vmatpush2.msra.mxu0 0.0
        %385 = vmatprep.subr.mxu0 0.0
        %386 = vmatpush2.msra.mxu0 0.0
        %387 = vmatprep.subr.mxu0 0.0
        %388 = vmatpush2.msra.mxu0 0.0
        %389 = vmatprep.subr.mxu0 0.0
        %390 = vmatpush2.msra.mxu0 0.0
        %391 = vmatprep.subr.mxu0 0.0
        %392 = vmatpush2.msra.mxu0 0.0
        %393 = vmatprep.subr.mxu0 0.0
        %394 = vmatpush2.msra.mxu0 0.0
        %395 = vmatprep.subr.mxu0 0.0
        %396 = vmatpush2.msra.mxu0 0.0
        %397 = vmatprep.subr.mxu0 0.0
        %398 = vmatpush2.msra.mxu0 0.0
        %399 = vmatprep.subr.mxu0 0.0
        %400 = vmatpush2.msra.mxu0 0.0
        %401 = vmatprep.subr.mxu0 0.0
        %402 = vmatpush2.msra.mxu0 0.0
        %403 = vmatprep.subr.mxu0 0.0
        %404 = vmatpush2.msra.mxu0 0.0
        %405 = vmatprep.subr.mxu0 0.0
        %406 = vmatpush2.msra.mxu0 0.0
        %407 = vmatprep.subr.mxu0 0.0
        %408 = vmatpush2.msra.mxu0 0.0
        %409 = vmatprep.subr.mxu0 0.0
        %410 = vmatpush2.msra.mxu0 0.0
        %411 = vmatprep.subr.mxu0 0.0
        %412 = vmatpush2.msra.mxu0 0.0
        %413 = vmatprep.subr.mxu0 0.0
        %414 = vmatpush2.msra.mxu0 0.0
        %415 = vmatprep.mubr.f32.mxu0 0.0
        %416 = vmatmul.mubr.f32.gmra.mxu0 %v340
        %v417 = vpop.f32.mrf.mxu0
        %v418 = vadd.f32 0.0, %v417
        %v419 = vpop.f32.mrf.mxu0
        %v420 = vadd.f32 0.0, %v419
        %421 = vmatprep.mubr.f32.mxu0 0.0
        %422 = vmatmul.mubr.f32.gmra.mxu0 %v343
        %v423 = vpop.f32.mrf.mxu0
        %v424 = vadd.f32 0.0, %v423
        %v425 = vpop.f32.mrf.mxu0
        %v426 = vadd.f32 0.0, %v425
        %427 = vmatprep.mubr.f32.mxu0 0.0
        %428 = vmatmul.mubr.f32.gmra.mxu0 %v346
        %v429 = vpop.f32.mrf.mxu0
        %v430 = vadd.f32 0.0, %v429
        %v431 = vpop.f32.mrf.mxu0
        %v432 = vadd.f32 0.0, %v431
        %433 = vmatprep.mubr.f32.mxu0 0.0
        %434 = vmatmul.mubr.f32.gmra.mxu0 %v349
        %v435 = vpop.f32.mrf.mxu0
        %v436 = vadd.f32 0.0, %v435
        %v437 = vpop.f32.mrf.mxu0
        %v438 = vadd.f32 0.0, %v437
        %439 = vdwg.mxu0
        %v440 = vld [vmem:[%s2] sm:$0xf]
        %v441 = vmul.f32 %v418, %v332
        %v442 = vmul.f32 %v420, %v333
        %v443 = vmul.f32 %v424, %v332
        %v444 = vmul.f32 %v426, %v333
        %v445 = vmul.f32 %v430, %v332
        %v446 = vmul.f32 %v432, %v333
        %v447 = vmul.f32 %v436, %v332
        %v448 = vmul.f32 %v438, %v333
        %vm449 = vcmask 261120
        %v451 = vsel %vm449, %v440, 0
        %453 = vmatprep.subr.mxu0 0.0
        %454 = vmatpush1.msra.mxu0 0.0
        %455 = vmatprep.subr.mxu0 0.0
        %456 = vmatpush1.msra.mxu0 0.0
        %457 = vmatprep.subr.mxu0 0.0
        %458 = vmatpush1.msra.mxu0 0.0
        %459 = vmatprep.subr.mxu0 0.0
        %460 = vmatpush1.msra.mxu0 0.0
        %461 = vmatprep.subr.mxu0 0.0
        %462 = vmatpush1.msra.mxu0 0.0
        %463 = vmatprep.subr.mxu0 0.0
        %464 = vmatpush1.msra.mxu0 0.0
        %465 = vmatprep.subr.mxu0 0.0
        %466 = vmatpush1.msra.mxu0 0.0
        %467 = vmatprep.subr.mxu0 0.0
        %468 = vmatpush1.msra.mxu0 0.0
        %469 = vmatprep.subr.mxu0 0.0
        %470 = vmatpush1.msra.mxu0 0.0
        %471 = vmatprep.subr.mxu0 0.0
        %472 = vmatpush1.msra.mxu0 0.0
        %473 = vmatprep.subr.mxu0 0.0
        %474 = vmatpush1.msra.mxu0 0.0
        %475 = vmatprep.subr.mxu0 0.0
        %476 = vmatpush1.msra.mxu0 0.0
        %477 = vmatprep.subr.mxu0 %v448
        %478 = vmatpush1.msra.mxu0 %v447
        %479 = vmatprep.subr.mxu0 %v446
        %480 = vmatpush1.msra.mxu0 %v445
        %481 = vmatprep.subr.mxu0 %v444
        %482 = vmatpush1.msra.mxu0 %v443
        %483 = vmatprep.subr.mxu0 %v442
        %484 = vmatpush1.msra.mxu0 %v441
        %485 = vmatprep.subr.mxu0 0.0
        %486 = vmatpush2.msra.mxu0 0.0
        %487 = vmatprep.subr.mxu0 0.0
        %488 = vmatpush2.msra.mxu0 0.0
        %489 = vmatprep.subr.mxu0 0.0
        %490 = vmatpush2.msra.mxu0 0.0
        %491 = vmatprep.subr.mxu0 0.0
        %492 = vmatpush2.msra.mxu0 0.0
        %493 = vmatprep.subr.mxu0 0.0
        %494 = vmatpush2.msra.mxu0 0.0
        %495 = vmatprep.subr.mxu0 0.0
        %496 = vmatpush2.msra.mxu0 0.0
        %497 = vmatprep.subr.mxu0 0.0
        %498 = vmatpush2.msra.mxu0 0.0
        %499 = vmatprep.subr.mxu0 0.0
        %500 = vmatpush2.msra.mxu0 0.0
        %501 = vmatprep.subr.mxu0 0.0
        %502 = vmatpush2.msra.mxu0 0.0
        %503 = vmatprep.subr.mxu0 0.0
        %504 = vmatpush2.msra.mxu0 0.0
        %505 = vmatprep.subr.mxu0 0.0
        %506 = vmatpush2.msra.mxu0 0.0
        %507 = vmatprep.subr.mxu0 0.0
        %508 = vmatpush2.msra.mxu0 0.0
        %509 = vmatprep.subr.mxu0 0.0
        %510 = vmatpush2.msra.mxu0 0.0
        %511 = vmatprep.subr.mxu0 0.0
        %512 = vmatpush2.msra.mxu0 0.0
        %513 = vmatprep.subr.mxu0 0.0
        %514 = vmatpush2.msra.mxu0 0.0
        %515 = vmatprep.subr.mxu0 0.0
        %516 = vmatpush2.msra.mxu0 0.0
        %517 = vmatprep.mubr.f32.mxu0 0.0
        %518 = vmatmul.mubr.f32.gmra.mxu0 %v451
        %v519 = vpop.f32.mrf.mxu0
        %v520 = vadd.f32 0.0, %v519
        %v521 = vpop.f32.mrf.mxu0
        %v522 = vadd.f32 0.0, %v521
        %523 = vdwg.mxu0
        %v524 = vld [vmem:[%s3] sm:$0xf]
        %v526 = vsel %vm338, %v524, 0
        %528 = vmatprep.subr.mxu0 0.0
        %529 = vmatpush1.msra.mxu0 0.0
        %530 = vmatprep.subr.mxu0 0.0
        %531 = vmatpush1.msra.mxu0 0.0
        %532 = vmatprep.subr.mxu0 0.0
        %533 = vmatpush1.msra.mxu0 0.0
        %534 = vmatprep.subr.mxu0 0.0
        %535 = vmatpush1.msra.mxu0 0.0
        %536 = vmatprep.subr.mxu0 0.0
        %537 = vmatpush1.msra.mxu0 0.0
        %538 = vmatprep.subr.mxu0 0.0
        %539 = vmatpush1.msra.mxu0 0.0
        %540 = vmatprep.subr.mxu0 0.0
        %541 = vmatpush1.msra.mxu0 0.0
        %542 = vmatprep.subr.mxu0 0.0
        %543 = vmatpush1.msra.mxu0 0.0
        %544 = vmatprep.subr.mxu0 0.0
        %545 = vmatpush1.msra.mxu0 0.0
        %546 = vmatprep.subr.mxu0 0.0
        %547 = vmatpush1.msra.mxu0 0.0
        %548 = vmatprep.subr.mxu0 0.0
        %549 = vmatpush1.msra.mxu0 0.0
        %550 = vmatprep.subr.mxu0 0.0
        %551 = vmatpush1.msra.mxu0 0.0
        %552 = vmatprep.subr.mxu0 0.0
        %553 = vmatpush1.msra.mxu0 0.0
        %554 = vmatprep.subr.mxu0 0.0
        %555 = vmatpush1.msra.mxu0 0.0
        %556 = vmatprep.subr.mxu0 0.0
        %557 = vmatpush1.msra.mxu0 0.0
        %558 = vmatprep.subr.mxu0 %v333
        %559 = vmatpush1.msra.mxu0 %v332
        %560 = vmatprep.subr.mxu0 0.0
        %561 = vmatpush2.msra.mxu0 0.0
        %562 = vmatprep.subr.mxu0 0.0
        %563 = vmatpush2.msra.mxu0 0.0
        %564 = vmatprep.subr.mxu0 0.0
        %565 = vmatpush2.msra.mxu0 0.0
        %566 = vmatprep.subr.mxu0 0.0
        %567 = vmatpush2.msra.mxu0 0.0
        %568 = vmatprep.subr.mxu0 0.0
        %569 = vmatpush2.msra.mxu0 0.0
        %570 = vmatprep.subr.mxu0 0.0
        %571 = vmatpush2.msra.mxu0 0.0
        %572 = vmatprep.subr.mxu0 0.0
        %573 = vmatpush2.msra.mxu0 0.0
        %574 = vmatprep.subr.mxu0 0.0
        %575 = vmatpush2.msra.mxu0 0.0
        %576 = vmatprep.subr.mxu0 0.0
        %577 = vmatpush2.msra.mxu0 0.0
        %578 = vmatprep.subr.mxu0 0.0
        %579 = vmatpush2.msra.mxu0 0.0
        %580 = vmatprep.subr.mxu0 0.0
        %581 = vmatpush2.msra.mxu0 0.0
        %582 = vmatprep.subr.mxu0 0.0
        %583 = vmatpush2.msra.mxu0 0.0
        %584 = vmatprep.subr.mxu0 0.0
        %585 = vmatpush2.msra.mxu0 0.0
        %586 = vmatprep.subr.mxu0 0.0
        %587 = vmatpush2.msra.mxu0 0.0
        %588 = vmatprep.subr.mxu0 0.0
        %589 = vmatpush2.msra.mxu0 0.0
        %590 = vmatprep.subr.mxu0 0.0
        %591 = vmatpush2.msra.mxu0 0.0
        %592 = vmatprep.mubr.f32.mxu0 0.0
        %593 = vmatmul.mubr.f32.gmra.mxu0 %v526
        %v594 = vpop.f32.mrf.mxu0
        %v595 = vadd.f32 0.0, %v594
        %v596 = vpop.f32.mrf.mxu0
        %v597 = vadd.f32 0.0, %v596
        %598 = vdwg.mxu0
        %v599 = vld [vmem:[%s4] sm:$0xf]
        %v600 = vld [vmem:[%s5] sm:$0xf]
        %v601 = vmul.f32 %v595, %v595
        %v602 = vmul.f32 %v597, %v597
        %604 = vset.pattern.permute.xlu0 0
        %605 = vperm.xlu0 %604, %v600
        %v606 = vpop.permute.xlu0 %605
        %v608 = vmul.f32 %v520, %v606
        %v609 = vmul.f32 %v522, %v606
        %v610 = vadd.f32 %v601, %v608
        %v611 = vadd.f32 %v602, %v609
        %v612 = vsub.f32 0.0, %v595
        %v613 = vsub.f32 0.0, %v597
        %v614 = vrsqrt.pop %v610
        %v615 = vmul.f32 %v610, %v614
        %vm616 = vcmp.eq.f32.partialorder %v610, inf
        %v617 = vsel %vm616, %v610, %v615
        %vm618 = vcmp.eq.f32.partialorder %v610, 0.0
        %v619 = vand.u32 %v610, 2147483648
        %v620 = vsel %vm618, %v619, %v617
        %v621 = vrsqrt.pop %v611
        %v622 = vmul.f32 %v611, %v621
        %vm623 = vcmp.eq.f32.partialorder %v611, inf
        %v624 = vsel %vm623, %v611, %v622
        %vm625 = vcmp.eq.f32.partialorder %v611, 0.0
        %v626 = vand.u32 %v611, 2147483648
        %v627 = vsel %vm625, %v626, %v624
        %v628 = vadd.f32 %v612, %v620
        %v629 = vadd.f32 %v613, %v627
        %v630 = vrcp.pop %v520
        %v631 = vmul.f32 %v628, %v630
        %v632 = vrcp.pop %v522
        %v633 = vmul.f32 %v629, %v632
        %635 = vset.pattern.permute.xlu0 0
        %636 = vperm.xlu0 %635, %v599
        %v637 = vpop.permute.xlu0 %636
        %v639 = vrcp.pop %v595
        %v640 = vmul.f32 %v637, %v639
        %v641 = vrcp.pop %v597
        %v642 = vmul.f32 %v637, %v641
        %v643 = vand.u32 2147483647, %v520
        %v644 = vand.u32 2147483647, %v522
        %vm645 = vcmp.le.f32.partialorder %v643, 1e-12
        %vm646 = vcmp.le.f32.partialorder %v644, 1e-12
        %v647 = vsel %vm645, %v640, %v631
        %v648 = vsel %vm646, %v642, %v633
        %vm649 = vcmp.ge.f32.partialorder %v647, 0.0
        %vm650 = vcmp.ge.f32.partialorder %v648, 0.0
        %v651 = vsel %vm649, %v647, inf
        %v652 = vsel %vm650, %v648, inf
        %vm653 = vcmask 1043456
        %v654 = vsel %vm653, %v651, inf
        %v655 = vrot.slane %v654, 4
        %v656 = vmin.f32 %v654, %v655
        %v657 = vrot.slane %v656, 2
        %v658 = vmin.f32 %v656, %v657
        %v659 = vrot.slane %v658, 1
        %v660 = vmin.f32 %v658, %v659
        %v661 = vsel %vm653, %v652, inf
        %v662 = vrot.slane %v661, 4
        %v663 = vmin.f32 %v661, %v662
        %v664 = vrot.slane %v663, 2
        %v665 = vmin.f32 %v663, %v664
        %v666 = vrot.slane %v665, 1
        %v667 = vmin.f32 %v665, %v666
        %v668 = vmul.f32 %v321, %v330
        %v669 = vmul.f32 %v327, %v331
        %v670 = vmax.f32 %v668, 1e-12
        %v671 = vmax.f32 %v669, 1e-12
        %v672 = vmin.f32 %v670, %v660
        %v673 = vmin.f32 %v671, %v667
        %v674 = vmul.f32 %v672, %v332
        %v675 = vmul.f32 %v673, %v333
        %v676 = vadd.f32 %v310, %v674
        %v677 = vadd.f32 %v310, %v675
        %678 = vst [vmem:[%s284] sm:$0xff] %v676
        %679 = vst [vmem:[%s284 + $0x8] sm:$0xff] %v677
        %s680 = sand.u32 %s181, 1
        %s681 = scalar_lea.sflag [#allocation3], %s680
        %s682 = sand.u32 %s181, 1
        %s683 = smul.addr %s682, 16
        %s684 = scalar_lea.vmem [#allocation2], %s683
        // Predicated region
        $region49: #{tpu_custom_call.1} parent=47 // pred_check
          %p685 = pneg %p191
        $region50: #{tpu_custom_call.1} parent=47 // pred_check_branch
          %687 = sbr.rel (%p685) target = $region52
        $region51: #{tpu_custom_call.1} parent=47 // pred_region
          %s688 = smul.u32 2, %s21
          %s689 = ssub.s32 3, %s688
          %p690 = scmp.lt.s32.totalorder %s689, 2
          %s691 = scalar_select %p690, %s689, 2
          %s692 = smul.u32 128, %s691
          %s694 = ssub.s32 256, %s692
          %695 = vsyncadd %s681, %s694
          %p696 = scmp.ne.s32.totalorder 0, %s692
          %s697 = smul.addr %s688, 128
          %s698 = scalar_lea.hbm %s7, %s697
          %s699 = smul.u32 %s691, 8
          %s700 = sshll.u32 %s699, 4
          %s701 = sshll.u32 %s684, 4
          %s702 = int_to_ptr.vmem [resolvable:$true] %s701
          %704 = dma.vmem_to_hbm [thread:$0]  (%p696), %s702, %s700, %s698, %s681
        $region52: #{tpu_custom_call.1} parent=47 // pred_fallthru
          _
      $region48: #{tpu_custom_call.1} parent=5 // pred_fallthru
        _
      %p705 = scmp.le.s32.totalorder 2, %s16
      // Predicated region
      $region53: #{tpu_custom_call.1} parent=5 // pred_check
        %p706 = pneg %p705
      $region54: #{tpu_custom_call.1} parent=5 // pred_check_branch
        %708 = sbr.rel (%p706) target = $region56
      $region55: #{tpu_custom_call.1} parent=5 // pred_region
        %s709 = ssub.s32 %s16, 2
        // Predicated region
        $region57: #{tpu_custom_call.1} parent=55 // pred_check
          %p710 = pneg %p197
        $region58: #{tpu_custom_call.1} parent=55 // pred_check_branch
          %712 = sbr.rel (%p710) target = $region60
        $region59: #{tpu_custom_call.1} parent=55 // pred_region
          %s713 = sand.u32 %s182, 1
          %s714 = scalar_lea.sflag [#allocation3], %s713
          %s715 = sand.u32 %s182, 1
          %s716 = smul.addr %s715, 16
          %s717 = scalar_lea.vmem [#allocation2], %s716
          %718 = dma.done %s714, 256
        $region60: #{tpu_custom_call.1} parent=55 // pred_fallthru
          _
      $region56: #{tpu_custom_call.1} parent=5 // pred_fallthru
        _
    $region6: #{tpu_custom_call.1} parent=1 // loop_footer
      %s20 = sadd.s32 1, %s16
    $region7: #{tpu_custom_call.1} parent=1 // loop_footer_branch
      %15 = sbr.rel target = $region3
    $region8: #{tpu_custom_call.1} parent=1 // loop_exit
      _
    %719 = vsyncpa [#allocation3], 1
    %s720 = scalar_lea.sflag [#allocation3], 1
    %721 = vsyncpa %s720, 1

</llo_original>
